<compile_context>
chip_gen: v7x
topology: tpu7x:2x2x1
jax: 0.10.0
libtpu: 0.0.40
codegen_flags: <defaults>
</compile_context>

<pallas_src>
import jax
import jax.numpy as jnp
from jax.experimental import pallas as pl
from jax.experimental.pallas import tpu as pltpu

_LANES = 128
_SUBLANES = 8
# 2048 rows x 128 lanes x 4 B = 1 MiB per block; in + out, double-buffered, is
# ~4 MiB — safely under every generation's scoped-VMEM default (16 MiB on v5e).
_MAX_TILE_ROWS = 2048


def _scale_bias_kernel(x_ref, wb_ref, o_ref):
    # x_ref: (tile_rows, lanes) f32 VMEM tile; wb_ref: (2,) f32 in SMEM = [w, b].
    w = wb_ref[0]
    b = wb_ref[1]
    o_ref[...] = x_ref[...] * w + b  # pure VPU scale+bias; no MXU involved.


def _scale_bias_pallas(x2d, wb, tile_rows):
    """Run the scale+bias kernel over a (rows, lanes) f32 slab; tile_rows | rows."""
    rows, lanes = x2d.shape
    grid = (rows // tile_rows,)
    block_bytes = tile_rows * lanes * 4
    return pl.pallas_call(
        _scale_bias_kernel,
        out_shape=jax.ShapeDtypeStruct((rows, lanes), jnp.float32),
        grid=grid,
        in_specs=[
            pl.BlockSpec((tile_rows, lanes), lambda i: (i, 0)),
            pl.BlockSpec(memory_space=pltpu.MemorySpace.SMEM),  # (2,) scalars
        ],
        out_specs=pl.BlockSpec((tile_rows, lanes), lambda i: (i, 0)),
        compiler_params=pltpu.CompilerParams(
            dimension_semantics=("parallel",),            # megacore-shardable axis
            vmem_limit_bytes=int(4 * block_bytes + (4 << 20)),
        ),
        cost_estimate=pl.CostEstimate(
            flops=2 * rows * lanes,
            bytes_accessed=8 * rows * lanes,
            transcendentals=0,
        ),
    )(x2d, wb)


def _select_tile_rows(rows):
    """Sublane-aligned tile height <= _MAX_TILE_ROWS, preferring >= 2 grid blocks."""
    if rows <= _SUBLANES:
        return rows                          # single block == full dim (legal)
    tile = min(_MAX_TILE_ROWS, rows)
    if tile == rows:                         # would be one block: split in two for v7x
        tile = rows // 2
    tile = max(_SUBLANES, (tile // _SUBLANES) * _SUBLANES)
    return tile


def linear_forward(x, weight, bias):
    """LinearModel forward. x: (N, 1) f32, weight: (1, 1), bias: (1,) -> (N, 1)."""
    n, in_f = x.shape
    out_f = weight.shape[0]
    assert in_f == 1 and out_f == 1, "LinearModel is Linear(1, 1)"

    # Scalars for SMEM: [w, b].
    wb = jnp.concatenate([weight.reshape(-1), bias.reshape(-1)]).astype(jnp.float32)
    x_flat = x.reshape(-1).astype(jnp.float32)   # (N, 1) -> (N,) is free

    if n == 0:
        return jnp.zeros((0, out_f), jnp.float32)

    if n < _LANES:
        # Too small for a lane-dense slab: one full-dim (1, n) block.
        y = _scale_bias_pallas(x_flat.reshape(1, n), wb, tile_rows=1)
        return y.reshape(n, out_f)

    rows = n // _LANES                       # complete 128-lane rows (free reshape)
    n_aligned = rows * _LANES
    tile_rows = _select_tile_rows(rows)
    rows_grid = (rows // tile_rows) * tile_rows
    n_grid = rows_grid * _LANES

    pieces = []
    # Main tiled slab: reshape of the aligned prefix, no padding copy.
    y_main = _scale_bias_pallas(
        x_flat[:n_grid].reshape(rows_grid, _LANES), wb, tile_rows)
    pieces.append(y_main.reshape(-1))

    if rows_grid < rows:
        # Leftover whole rows (< tile_rows of them): one full-dim block.
        rem_rows = rows - rows_grid
        y_rem = _scale_bias_pallas(
            x_flat[n_grid:n_aligned].reshape(rem_rows, _LANES), wb,
            tile_rows=rem_rows)
        pieces.append(y_rem.reshape(-1))

    if n_aligned < n:
        # <128-element ragged tail: trivial elementwise jnp (cheaper than padding).
        tail = x_flat[n_aligned:]
        pieces.append(tail * wb[0] + wb[1])

    y_flat = pieces[0] if len(pieces) == 1 else jnp.concatenate(pieces)
    return y_flat.reshape(n, out_f)


if __name__ == "__main__":
    key = jax.random.PRNGKey(0)
    kx, kw, kb = jax.random.split(key, 3)

    # LinearModel: torch.nn.Linear(1, 1) -> weight (1, 1), bias (1,)
    weight = jax.random.uniform(kw, (1, 1), jnp.float32, -1.0, 1.0)
    bias = jax.random.uniform(kb, (1,), jnp.float32, -1.0, 1.0)

    fwd = jax.jit(linear_forward)

    # Small batch consistent with the forward: batch=8, in_features=1.
    x = jax.random.normal(kx, (8, 1), jnp.float32)
    y = jax.block_until_ready(fwd(x, weight, bias))
    y_ref = x @ weight.T + bias
    assert y.shape == (8, 1)
    assert jnp.allclose(y, y_ref, atol=1e-5), "mismatch vs reference (N=8)"

    # Ragged N: single-block kernel slab + <128-element jnp tail.
    x2 = jax.random.normal(kx, (300, 1), jnp.float32)
    y2 = jax.block_until_ready(fwd(x2, weight, bias))
    y2_ref = x2 @ weight.T + bias
    assert y2.shape == (300, 1)
    assert jnp.allclose(y2, y2_ref, atol=1e-5), "mismatch vs reference (N=300)"

    # Multi-block grid (grid=2) + leftover-rows block + ragged tail.
    x3 = jax.random.normal(kx, (2597, 1), jnp.float32)
    y3 = jax.block_until_ready(fwd(x3, weight, bias))
    y3_ref = x3 @ weight.T + bias
    assert y3.shape == (2597, 1)
    assert jnp.allclose(y3, y3_ref, atol=1e-5), "mismatch vs reference (N=2597)"

    print("KERNEL_OK")
</pallas_src>

<mosaic_0001>
module attributes {stable_mosaic.version = 11 : i64} {
  func.func @_scale_bias_kernel(%arg0: i32, %arg1: memref<1x8xf32, #tpu.memory_space<vmem>>, %arg2: memref<2xf32, #tpu.memory_space<smem>>, %arg3: memref<1x8xf32, #tpu.memory_space<vmem>>) attributes {dimension_semantics = [#tpu.dimension_semantics<parallel>], iteration_bounds = array<i64: 1>, scalar_prefetch = 0 : i64, scratch_operands = 0 : i64, tpu.core_type = #tpu.core_type<tc>, window_params = [{transform_indices = @transform_0, window_bounds = array<i64: 1, 8>}, {transform_indices = @transform_1, window_bounds = array<i64: 2>}, {transform_indices = @transform_2, window_bounds = array<i64: 1, 8>}]} {
    %c0 = arith.constant 0 : index
    %0 = memref.load %arg2[%c0] : memref<2xf32, #tpu.memory_space<smem>>
    %c1 = arith.constant 1 : index
    %1 = memref.load %arg2[%c1] : memref<2xf32, #tpu.memory_space<smem>>
    %c0_0 = arith.constant 0 : index
    %c0_1 = arith.constant 0 : index
    %2 = vector.load %arg1[%c0_0, %c0_1] : memref<1x8xf32, #tpu.memory_space<vmem>>, vector<1x8xf32>
    %3 = vector.broadcast %0 : f32 to vector<1x8xf32>
    %4 = arith.mulf %2, %3 : vector<1x8xf32>
    %5 = vector.broadcast %1 : f32 to vector<1x8xf32>
    %6 = arith.addf %4, %5 : vector<1x8xf32>
    %c0_2 = arith.constant 0 : index
    %c0_3 = arith.constant 0 : index
    %7 = vector.load %arg3[%c0_2, %c0_3] : memref<1x8xf32, #tpu.memory_space<vmem>>, vector<1x8xf32>
    tpu.vector_store %arg3[%c0_2, %c0_3], %6 {strides = array<i32>} : memref<1x8xf32, #tpu.memory_space<vmem>>, vector<1x8xf32>,
    return
  }
  func.func @transform_0(%arg0: i32) -> (i32, i32) {
    %c0_i32 = arith.constant 0 : i32
    %c0_i32_0 = arith.constant 0 : i32
    return %arg0, %c0_i32 : i32, i32
  }
  func.func @transform_1(%arg0: i32) -> i32 {
    %c0_i32 = arith.constant 0 : i32
    %c0_i32_0 = arith.constant 0 : i32
    return %c0_i32 : i32
  }
  func.func @transform_2(%arg0: i32) -> (i32, i32) {
    %c0_i32 = arith.constant 0 : i32
    %c0_i32_0 = arith.constant 0 : i32
    return %arg0, %c0_i32 : i32, i32
  }
}

</mosaic_0001>

<llo_original>
// kernel: linear_forward.1
$region0: #{linear_forward.1}
  #allocation0 [shape = 'u32[]', space=smem, size = 0x4, offset = 0x4, fixed_abs, tag = 'smem constant byte address 0x4 - core index']
  #allocation1 [shape = 'u32[144,128]{1,0:T(1,128)}', space=vmem, size = 0x12000, scoped, tag = 'internal scratch']
  %s0 = inlined_call_operand.vmem [shape: f32[1,8], index: 0, kind: input, shape index: {}]
  %s1 = inlined_call_operand.vmem [shape: f32[2], index: 1, kind: input, shape index: {}]
  %s2 = inlined_call_operand.hbm [shape: f32[1,8], index: 2, kind: output, shape index: {}]
  %s3 = sld [smem:[#allocation0]]
  $region22: #{linear_forward.1} parent=0
    _
  %s5 = ssub.s32 1, %s3
  %s6 = scalar_select 0, %s5, %s3
  $region1: #{linear_forward.1} parent=0
    #allocation2 [shape = 'u8[512]{0}', space=smem, size = 0x200, scoped, tag = 'input window, operand 1, single buffered']
    #allocation3 [shape = 's32[1]{0}', space=sflag, size = 0x4, scoped, tag = 'scoped memory for linear_forward.1']
    #allocation4 [shape = 's32[1]{0}', space=sflag, size = 0x4, scoped, tag = 'scoped memory for linear_forward.1']
    #allocation5 [shape = 'u8[512]{0}', space=vmem, size = 0x400, scoped, tag = 'output window, operand 0, single buffered']
    %7 = vsyncpa [#allocation4], 0
    %8 = vsyncpa [#allocation3], 0
    // Predicated region
    $region2: #{linear_forward.1} parent=1 // pred_check
      _
    $region3: #{linear_forward.1} parent=1 // pred_check_branch
      %10 = sbr.rel (0) target = $region5
    $region4: #{linear_forward.1} parent=1 // pred_region
      _
    $region5: #{linear_forward.1} parent=1 // pred_fallthru
      _
    // Predicated region
    $region6: #{linear_forward.1} parent=1 // pred_check
      _
    $region7: #{linear_forward.1} parent=1 // pred_check_branch
      %12 = sbr.rel (0) target = $region9
    $region8: #{linear_forward.1} parent=1 // pred_region
      %s14 = ssub.s32 16, 16
      %15 = vsyncadd [#allocation4], %s14
      %s17 = sshll.u32 %s1, 4
      %s18 = int_to_ptr.vmem [resolvable:$true] %s17
      %20 = dma.vmem_to_smem %s18, 16, [#allocation2], [#allocation4]
    $region9: #{linear_forward.1} parent=1 // pred_fallthru
      _
    // Predicated region
    $region10: #{linear_forward.1} parent=1 // pred_check
      _
    $region11: #{linear_forward.1} parent=1 // pred_check_branch
      %22 = sbr.rel (0) target = $region13
    $region12: #{linear_forward.1} parent=1 // pred_region
      %23 = dma.done [#allocation4], 16
    $region13: #{linear_forward.1} parent=1 // pred_fallthru
      _
    %24 = sfence
    %s25 = sld [smem:[#allocation2]]
    %s26 = sld [smem:[#allocation2 + $0x1]]
    %v27 = vld [vmem:[%s0] sm:$0x1]
    %v28 = vstv %s25
    %v29 = vmul.f32 %v27, %v28
    %v30 = vstv %s26
    %v31 = vadd.f32 %v29, %v30
    %vm32 = vcmask 57344
    %33 = vst.msk [vmem:[#allocation5] sm:$0x1] %vm32, %v31
    // Predicated region
    $region14: #{linear_forward.1} parent=1 // pred_check
      _
    $region15: #{linear_forward.1} parent=1 // pred_check_branch
      %35 = sbr.rel (0) target = $region17
    $region16: #{linear_forward.1} parent=1 // pred_region
      %s37 = ssub.s32 16, 16
      %38 = vsyncadd [#allocation3], %s37
      %s40 = sshll.u32 [#allocation5], 4
      %s41 = int_to_ptr.vmem [resolvable:$true] %s40
      %43 = dma.vmem_to_hbm [thread:$0]  %s41, 16, %s2, [#allocation3]
    $region17: #{linear_forward.1} parent=1 // pred_fallthru
      _
    // Predicated region
    $region18: #{linear_forward.1} parent=1 // pred_check
      _
    $region19: #{linear_forward.1} parent=1 // pred_check_branch
      %45 = sbr.rel (0) target = $region21
    $region20: #{linear_forward.1} parent=1 // pred_region
      %46 = dma.done [#allocation3], 16
    $region21: #{linear_forward.1} parent=1 // pred_fallthru
      _
    %47 = vsyncpa [#allocation3], 1
    %48 = vsyncpa [#allocation4], 1

</llo_original>
